<compile_context>
chip_gen: v7x
topology: tpu7x:2x2x1
jax: 0.10.0
libtpu: 0.0.40
codegen_flags: <defaults>
</compile_context>

<pallas_src>
import jax
import jax.numpy as jnp
from jax.experimental import pallas as pl
from jax.experimental.pallas import tpu as pltpu


def obj_fe_kernel(x_ref, w_ref, b_ref, out_ref):
    # x_ref : (bm, p*S)   packed input rows for this grid step
    # w_ref : (p*S, p*D)  block-diagonal folded weight (resident)
    # b_ref : (1,  p*D)   tiled folded bias
    # out   : (bm, p*D)
    out_ref[...] = (
        jnp.dot(x_ref[...], w_ref[...], preferred_element_type=jnp.float32)
        + b_ref[...]
    ).astype(out_ref.dtype)


def _choose_pack(S, D, target_lanes=256):
    """Smallest object-packing factor making both lane widths multiples of 128,
    preferring ~256 lanes (fills the v6e/v7x 256-wide MXU; 128 feeds v5e)."""
    for cand in (target_lanes // max(S, D), 128 // max(S, D)):
        if cand >= 1 and (cand * S) % 128 == 0 and (cand * D) % 128 == 0:
            return cand
    return 1  # fallback: no packing (correct, just not lane-dense)


def pack_obj_fe_params(w1, b1, w2, b2, w3, b3, target_lanes=256):
    """Fold the activation-free 3-layer stack into ONE affine map (exact since
    there are no nonlinearities) and build the lane-dense block-diagonal
    weight / tiled bias once, offline."""
    hi = jax.lax.Precision.HIGHEST
    w1, w2, w3 = (jnp.asarray(w, jnp.float32) for w in (w1, w2, w3))
    b1, b2, b3 = (jnp.asarray(b, jnp.float32) for b in (b1, b2, b3))

    # y = ((x W1^T + b1) W2^T + b2) W3^T + b3  ==  x @ Wc + bc
    Wc = jnp.dot(jnp.dot(w1.T, w2.T, precision=hi), w3.T, precision=hi)      # (S, D)
    bc = jnp.dot(jnp.dot(b1, w2.T, precision=hi) + b2, w3.T, precision=hi) + b3  # (D,)

    S, D = Wc.shape
    p = _choose_pack(S, D, target_lanes)
    Wbd = jnp.kron(jnp.eye(p, dtype=Wc.dtype), Wc)   # (p*S, p*D) block-diagonal
    bbd = jnp.tile(bc, p).reshape(1, p * D)          # (1, p*D)
    return Wbd, bbd, S, D, p


def obj_fe_forward(obj, packed, block_rows=1024):
    """Equivalent of Obj_fe.forward(obj) for obj of shape (B, size_obj_max)."""
    Wbd, bbd, S, D, p = packed
    B, d_in = obj.shape
    assert d_in == S, (d_in, S)
    dtype = obj.dtype

    # Pack p consecutive objects per lane-dense row (free row-major reshape).
    rows = pl.cdiv(B, p)

    # Batch tiling: one big block when it fits; otherwise 1024-row blocks.
    # For largish single-block batches, split into 2 blocks so v7x's two
    # TensorCores both get work (v5e/v6e: the split is harmless).
    if rows <= block_rows:
        bm = rows
        if rows > 256:
            bm = ((pl.cdiv(rows, 2) + 7) // 8) * 8   # two 8-aligned blocks
    else:
        bm = block_rows
    grid_n = pl.cdiv(rows, bm)
    rows_padded = grid_n * bm
    B_padded = rows_padded * p
    if B_padded != B:
        obj = jnp.pad(obj, ((0, B_padded - B), (0, 0)))
    x = obj.reshape(rows_padded, p * S)

    out = pl.pallas_call(
        obj_fe_kernel,
        out_shape=jax.ShapeDtypeStruct((rows_padded, p * D), dtype),
        grid_spec=pltpu.PrefetchScalarGridSpec(
            num_scalar_prefetch=0,
            grid=(grid_n,),
            in_specs=[
                pl.BlockSpec((bm, p * S), lambda i: (i, 0)),   # packed input rows
                pl.BlockSpec(Wbd.shape, lambda i: (0, 0)),     # weight, resident
                pl.BlockSpec(bbd.shape, lambda i: (0, 0)),     # bias, resident
            ],
            out_specs=pl.BlockSpec((bm, p * D), lambda i: (i, 0)),
        ),
        compiler_params=pltpu.CompilerParams(
            dimension_semantics=("parallel",)),
    )(x, Wbd, bbd)

    out = out.reshape(rows_padded * p, D)
    return out[:B] if B_padded != B else out


if __name__ == "__main__":
    SIZE_OBJ_MAX = 32          # size_obj_max
    OBJ_FEATURE_DIM = 32       # obj_feature_extractor_dim
    BATCH = 8

    key = jax.random.PRNGKey(0)
    k = jax.random.split(key, 7)

    # Mimic PyTorch nn.Linear default init: U(-1/sqrt(fan_in), 1/sqrt(fan_in))
    def linear_init(kw, kb, fan_in, fan_out):
        bound = 1.0 / (fan_in ** 0.5)
        w = jax.random.uniform(kw, (fan_out, fan_in), jnp.float32, -bound, bound)
        b = jax.random.uniform(kb, (fan_out,), jnp.float32, -bound, bound)
        return w, b

    w1, b1 = linear_init(k[0], k[1], SIZE_OBJ_MAX, SIZE_OBJ_MAX)
    w2, b2 = linear_init(k[2], k[3], SIZE_OBJ_MAX, OBJ_FEATURE_DIM)
    w3, b3 = linear_init(k[4], k[5], OBJ_FEATURE_DIM, OBJ_FEATURE_DIM)
    obj = jax.random.normal(k[6], (BATCH, SIZE_OBJ_MAX), jnp.float32)

    # NOTE: at BATCH=8 the whole problem is ~50 KFLOPs and the fixed
    # pallas_call dispatch cost dominates; in a real model this should be
    # called with a large object batch or fused into the surrounding graph.
    packed = pack_obj_fe_params(w1, b1, w2, b2, w3, b3)
    out = jax.block_until_ready(obj_fe_forward(obj, packed))

    # Pure-JAX reference of the PyTorch forward: three chained Linear layers.
    ref = ((obj @ w1.T + b1) @ w2.T + b2) @ w3.T + b3

    assert out.shape == (BATCH, OBJ_FEATURE_DIM), out.shape
    assert jnp.allclose(out, ref, atol=2e-5, rtol=2e-5), (out, ref)

    print("KERNEL_OK")
</pallas_src>

<mosaic_0001>
module attributes {stable_mosaic.version = 11 : i64} {
  func.func @obj_fe_kernel(%arg0: i32, %arg1: memref<1x256xf32, #tpu.memory_space<vmem>>, %arg2: memref<256x256xf32, #tpu.memory_space<vmem>>, %arg3: memref<1x256xf32, #tpu.memory_space<vmem>>, %arg4: memref<1x256xf32, #tpu.memory_space<vmem>>) attributes {dimension_semantics = [#tpu.dimension_semantics<parallel>], iteration_bounds = array<i64: 1>, scalar_prefetch = 0 : i64, scratch_operands = 0 : i64, tpu.core_type = #tpu.core_type<tc>, window_params = [{transform_indices = @transform_0, window_bounds = array<i64: 1, 256>}, {pipeline_mode = #tpu.pipeline_mode<synchronous>, transform_indices = @transform_1, window_bounds = array<i64: 256, 256>}, {pipeline_mode = #tpu.pipeline_mode<synchronous>, transform_indices = @transform_2, window_bounds = array<i64: 1, 256>}, {transform_indices = @transform_3, window_bounds = array<i64: 1, 256>}]} {
    %c0 = arith.constant 0 : index
    %c0_0 = arith.constant 0 : index
    %0 = vector.load %arg1[%c0, %c0_0] : memref<1x256xf32, #tpu.memory_space<vmem>>, vector<1x256xf32>
    %c0_1 = arith.constant 0 : index
    %c0_2 = arith.constant 0 : index
    %1 = vector.load %arg2[%c0_1, %c0_2] : memref<256x256xf32, #tpu.memory_space<vmem>>, vector<256x256xf32>
    %cst = arith.constant dense<0.000000e+00> : vector<1x256xf32>
    %2 = tpu.matmul %0, %1, %cst {dimension_numbers = #tpu.dot_dimension_numbers<[1], [0], [0], [1], [0, 0, 1, 1], [], []>} : vector<1x256xf32>, vector<256x256xf32>, vector<1x256xf32> -> vector<1x256xf32>
    %c0_3 = arith.constant 0 : index
    %c0_4 = arith.constant 0 : index
    %3 = vector.load %arg3[%c0_3, %c0_4] : memref<1x256xf32, #tpu.memory_space<vmem>>, vector<1x256xf32>
    %4 = arith.addf %2, %3 : vector<1x256xf32>
    %c0_5 = arith.constant 0 : index
    %c0_6 = arith.constant 0 : index
    %5 = vector.load %arg4[%c0_5, %c0_6] : memref<1x256xf32, #tpu.memory_space<vmem>>, vector<1x256xf32>
    tpu.vector_store %arg4[%c0_5, %c0_6], %4 {strides = array<i32>} : memref<1x256xf32, #tpu.memory_space<vmem>>, vector<1x256xf32>,
    return
  }
  func.func @transform_0(%arg0: i32) -> (i32, i32) {
    %c0_i32 = arith.constant 0 : i32
    %c0_i32_0 = arith.constant 0 : i32
    return %arg0, %c0_i32 : i32, i32
  }
  func.func @transform_1(%arg0: i32) -> (i32, i32) {
    %c0_i32 = arith.constant 0 : i32
    %c0_i32_0 = arith.constant 0 : i32
    %c0_i32_1 = arith.constant 0 : i32
    return %c0_i32, %c0_i32_0 : i32, i32
  }
  func.func @transform_2(%arg0: i32) -> (i32, i32) {
    %c0_i32 = arith.constant 0 : i32
    %c0_i32_0 = arith.constant 0 : i32
    %c0_i32_1 = arith.constant 0 : i32
    return %c0_i32, %c0_i32_0 : i32, i32
  }
  func.func @transform_3(%arg0: i32) -> (i32, i32) {
    %c0_i32 = arith.constant 0 : i32
    %c0_i32_0 = arith.constant 0 : i32
    return %arg0, %c0_i32 : i32, i32
  }
}

</mosaic_0001>

<llo_original>
// kernel: tpu_custom_call.1
$region0: #{tpu_custom_call.1}
  #allocation0 [shape = 'u32[]', space=smem, size = 0x4, offset = 0x4, fixed_abs, tag = 'smem constant byte address 0x4 - core index']
  #allocation1 [shape = 'u32[144,128]{1,0:T(1,128)}', space=vmem, size = 0x12000, scoped, tag = 'internal scratch']
  %s0 = inlined_call_operand.hbm [shape: f32[1,256], index: 0, kind: input, shape index: {}]
  %s1 = inlined_call_operand.hbm [shape: f32[256,256], index: 1, kind: input, shape index: {}]
  %s2 = inlined_call_operand.vmem [shape: f32[1,256], index: 2, kind: input, shape index: {}]
  %s3 = inlined_call_operand.hbm [shape: f32[1,256], index: 3, kind: output, shape index: {}]
  %s4 = sld [smem:[#allocation0]]
  $region30: #{tpu_custom_call.1} parent=0
    _
  %s6 = ssub.s32 1, %s4
  %s7 = scalar_select 0, %s6, %s4
  $region1: #{tpu_custom_call.1} parent=0
    #allocation2 [shape = 'u8[1024]{0}', space=vmem, size = 0x400, scoped, tag = 'input window, operand 0, single buffered']
    #allocation3 [shape = 's32[1]{0}', space=sflag, size = 0x4, scoped, tag = 'scoped memory for tpu_custom_call.1']
    #allocation4 [shape = 's32[1]{0}', space=sflag, size = 0x4, scoped, tag = 'scoped memory for tpu_custom_call.1']
    #allocation5 [shape = 'u8[262144]{0}', space=vmem, size = 0x40000, scoped, tag = 'input window, operand 1, single buffered']
    #allocation6 [shape = 's32[1]{0}', space=sflag, size = 0x4, scoped, tag = 'scoped memory for tpu_custom_call.1']
    #allocation7 [shape = 'u8[1024]{0}', space=vmem, size = 0x400, scoped, tag = 'output window, operand 0, single buffered']
    %8 = vsyncpa [#allocation3], 0
    %9 = vsyncpa [#allocation6], 0
    %10 = vsyncpa [#allocation4], 0
    // Predicated region
    $region2: #{tpu_custom_call.1} parent=1 // pred_check
      _
    $region3: #{tpu_custom_call.1} parent=1 // pred_check_branch
      %12 = sbr.rel (0) target = $region5
    $region4: #{tpu_custom_call.1} parent=1 // pred_region
      %s14 = ssub.s32 32, 32
      %15 = vsyncadd [#allocation3], %s14
      %s17 = sshll.u32 [#allocation2], 4
      %s18 = int_to_ptr.vmem [resolvable:$true] %s17
      %20 = dma.hbm_to_vmem [thread:$0]  %s0, 32, %s18, [#allocation3]
    $region5: #{tpu_custom_call.1} parent=1 // pred_fallthru
      _
    // Predicated region
    $region6: #{tpu_custom_call.1} parent=1 // pred_check
      _
    $region7: #{tpu_custom_call.1} parent=1 // pred_check_branch
      %22 = sbr.rel (0) target = $region9
    $region8: #{tpu_custom_call.1} parent=1 // pred_region
      %s24 = ssub.s32 8192, 8192
      %25 = vsyncadd [#allocation6], %s24
      %s26 = sshll.u32 [#allocation5], 4
      %s27 = int_to_ptr.vmem [resolvable:$true] %s26
      %32 = dma.hbm_to_vmem [thread:$0]  %s1, 8192, %s27, [#allocation6], 256, 256, 16
    $region9: #{tpu_custom_call.1} parent=1 // pred_fallthru
      _
    // Predicated region
    $region10: #{tpu_custom_call.1} parent=1 // pred_check
      _
    $region11: #{tpu_custom_call.1} parent=1 // pred_check_branch
      %34 = sbr.rel (0) target = $region13
    $region12: #{tpu_custom_call.1} parent=1 // pred_region
      _
    $region13: #{tpu_custom_call.1} parent=1 // pred_fallthru
      _
    // Predicated region
    $region14: #{tpu_custom_call.1} parent=1 // pred_check
      _
    $region15: #{tpu_custom_call.1} parent=1 // pred_check_branch
      %36 = sbr.rel (0) target = $region17
    $region16: #{tpu_custom_call.1} parent=1 // pred_region
      %37 = dma.done [#allocation3], 32
    $region17: #{tpu_custom_call.1} parent=1 // pred_fallthru
      _
    // Predicated region
    $region18: #{tpu_custom_call.1} parent=1 // pred_check
      _
    $region19: #{tpu_custom_call.1} parent=1 // pred_check_branch
      %39 = sbr.rel (0) target = $region21
    $region20: #{tpu_custom_call.1} parent=1 // pred_region
      %40 = dma.done [#allocation6], 8192
    $region21: #{tpu_custom_call.1} parent=1 // pred_fallthru
      _
    %v41 = vld [vmem:[#allocation2] sm:$0x3]
    %v42 = vld [vmem:[#allocation5] sm:$0xff]
    %v43 = vld [vmem:[#allocation5 + $0x8] sm:$0xff]
    %v44 = vld [vmem:[#allocation5 + $0x10] sm:$0xff]
    %v45 = vld [vmem:[#allocation5 + $0x18] sm:$0xff]
    %v46 = vld [vmem:[#allocation5 + $0x20] sm:$0xff]
    %v47 = vld [vmem:[#allocation5 + $0x28] sm:$0xff]
    %v48 = vld [vmem:[#allocation5 + $0x30] sm:$0xff]
    %v49 = vld [vmem:[#allocation5 + $0x38] sm:$0xff]
    %v50 = vld [vmem:[#allocation5 + $0x40] sm:$0xff]
    %v51 = vld [vmem:[#allocation5 + $0x48] sm:$0xff]
    %v52 = vld [vmem:[#allocation5 + $0x50] sm:$0xff]
    %v53 = vld [vmem:[#allocation5 + $0x58] sm:$0xff]
    %v54 = vld [vmem:[#allocation5 + $0x60] sm:$0xff]
    %v55 = vld [vmem:[#allocation5 + $0x68] sm:$0xff]
    %v56 = vld [vmem:[#allocation5 + $0x70] sm:$0xff]
    %v57 = vld [vmem:[#allocation5 + $0x78] sm:$0xff]
    %v58 = vld [vmem:[#allocation5 + $0x80] sm:$0xff]
    %v59 = vld [vmem:[#allocation5 + $0x88] sm:$0xff]
    %v60 = vld [vmem:[#allocation5 + $0x90] sm:$0xff]
    %v61 = vld [vmem:[#allocation5 + $0x98] sm:$0xff]
    %v62 = vld [vmem:[#allocation5 + $0xa0] sm:$0xff]
    %v63 = vld [vmem:[#allocation5 + $0xa8] sm:$0xff]
    %v64 = vld [vmem:[#allocation5 + $0xb0] sm:$0xff]
    %v65 = vld [vmem:[#allocation5 + $0xb8] sm:$0xff]
    %v66 = vld [vmem:[#allocation5 + $0xc0] sm:$0xff]
    %v67 = vld [vmem:[#allocation5 + $0xc8] sm:$0xff]
    %v68 = vld [vmem:[#allocation5 + $0xd0] sm:$0xff]
    %v69 = vld [vmem:[#allocation5 + $0xd8] sm:$0xff]
    %v70 = vld [vmem:[#allocation5 + $0xe0] sm:$0xff]
    %v71 = vld [vmem:[#allocation5 + $0xe8] sm:$0xff]
    %v72 = vld [vmem:[#allocation5 + $0xf0] sm:$0xff]
    %v73 = vld [vmem:[#allocation5 + $0xf8] sm:$0xff]
    %v74 = vld [vmem:[#allocation5 + $0x100] sm:$0xff]
    %v75 = vld [vmem:[#allocation5 + $0x108] sm:$0xff]
    %v76 = vld [vmem:[#allocation5 + $0x110] sm:$0xff]
    %v77 = vld [vmem:[#allocation5 + $0x118] sm:$0xff]
    %v78 = vld [vmem:[#allocation5 + $0x120] sm:$0xff]
    %v79 = vld [vmem:[#allocation5 + $0x128] sm:$0xff]
    %v80 = vld [vmem:[#allocation5 + $0x130] sm:$0xff]
    %v81 = vld [vmem:[#allocation5 + $0x138] sm:$0xff]
    %v82 = vld [vmem:[#allocation5 + $0x140] sm:$0xff]
    %v83 = vld [vmem:[#allocation5 + $0x148] sm:$0xff]
    %v84 = vld [vmem:[#allocation5 + $0x150] sm:$0xff]
    %v85 = vld [vmem:[#allocation5 + $0x158] sm:$0xff]
    %v86 = vld [vmem:[#allocation5 + $0x160] sm:$0xff]
    %v87 = vld [vmem:[#allocation5 + $0x168] sm:$0xff]
    %v88 = vld [vmem:[#allocation5 + $0x170] sm:$0xff]
    %v89 = vld [vmem:[#allocation5 + $0x178] sm:$0xff]
    %v90 = vld [vmem:[#allocation5 + $0x180] sm:$0xff]
    %v91 = vld [vmem:[#allocation5 + $0x188] sm:$0xff]
    %v92 = vld [vmem:[#allocation5 + $0x190] sm:$0xff]
    %v93 = vld [vmem:[#allocation5 + $0x198] sm:$0xff]
    %v94 = vld [vmem:[#allocation5 + $0x1a0] sm:$0xff]
    %v95 = vld [vmem:[#allocation5 + $0x1a8] sm:$0xff]
    %v96 = vld [vmem:[#allocation5 + $0x1b0] sm:$0xff]
    %v97 = vld [vmem:[#allocation5 + $0x1b8] sm:$0xff]
    %v98 = vld [vmem:[#allocation5 + $0x1c0] sm:$0xff]
    %v99 = vld [vmem:[#allocation5 + $0x1c8] sm:$0xff]
    %v100 = vld [vmem:[#allocation5 + $0x1d0] sm:$0xff]
    %v101 = vld [vmem:[#allocation5 + $0x1d8] sm:$0xff]
    %v102 = vld [vmem:[#allocation5 + $0x1e0] sm:$0xff]
    %v103 = vld [vmem:[#allocation5 + $0x1e8] sm:$0xff]
    %v104 = vld [vmem:[#allocation5 + $0x1f0] sm:$0xff]
    %v105 = vld [vmem:[#allocation5 + $0x1f8] sm:$0xff]
    %v106 = vld [vmem:[%s2] sm:$0x3]
    %v108 = vlaneseq
    %v109 = vshrl.u32 %v108, 7
    %v110 = vsub.s32 0, %v109
    %v111 = vrot.slane %v41, %v110
    %v112 = vlaneseq
    %v113 = vshrl.u32 %v112, 7
    %v114 = vsub.s32 1, %v113
    %v115 = vrot.slane %v41, %v114
    %v119 = vlaneseq
    %v120 = vshrl.u32 %v119, 7
    %v121 = vsub.s32 0, %v120
    %v122 = vrot.slane %v106, %v121
    %v123 = vlaneseq
    %v124 = vshrl.u32 %v123, 7
    %v125 = vsub.s32 1, %v124
    %v126 = vrot.slane %v106, %v125
    %129 = vmatprep.subr.mxu0 %v43
    %130 = vmatpush1.msra.mxu0 %v42
    %131 = vmatprep.subr.mxu0 %v45
    %132 = vmatpush1.msra.mxu0 %v44
    %133 = vmatprep.subr.mxu0 %v47
    %134 = vmatpush1.msra.mxu0 %v46
    %135 = vmatprep.subr.mxu0 %v49
    %136 = vmatpush1.msra.mxu0 %v48
    %137 = vmatprep.subr.mxu0 %v51
    %138 = vmatpush1.msra.mxu0 %v50
    %139 = vmatprep.subr.mxu0 %v53
    %140 = vmatpush1.msra.mxu0 %v52
    %141 = vmatprep.subr.mxu0 %v55
    %142 = vmatpush1.msra.mxu0 %v54
    %143 = vmatprep.subr.mxu0 %v57
    %144 = vmatpush1.msra.mxu0 %v56
    %145 = vmatprep.subr.mxu0 %v59
    %146 = vmatpush1.msra.mxu0 %v58
    %147 = vmatprep.subr.mxu0 %v61
    %148 = vmatpush1.msra.mxu0 %v60
    %149 = vmatprep.subr.mxu0 %v63
    %150 = vmatpush1.msra.mxu0 %v62
    %151 = vmatprep.subr.mxu0 %v65
    %152 = vmatpush1.msra.mxu0 %v64
    %153 = vmatprep.subr.mxu0 %v67
    %154 = vmatpush1.msra.mxu0 %v66
    %155 = vmatprep.subr.mxu0 %v69
    %156 = vmatpush1.msra.mxu0 %v68
    %157 = vmatprep.subr.mxu0 %v71
    %158 = vmatpush1.msra.mxu0 %v70
    %159 = vmatprep.subr.mxu0 %v73
    %160 = vmatpush1.msra.mxu0 %v72
    %161 = vmatprep.subr.mxu0 %v75
    %162 = vmatpush1.msra.mxu0 %v74
    %163 = vmatprep.subr.mxu0 %v77
    %164 = vmatpush1.msra.mxu0 %v76
    %165 = vmatprep.subr.mxu0 %v79
    %166 = vmatpush1.msra.mxu0 %v78
    %167 = vmatprep.subr.mxu0 %v81
    %168 = vmatpush1.msra.mxu0 %v80
    %169 = vmatprep.subr.mxu0 %v83
    %170 = vmatpush1.msra.mxu0 %v82
    %171 = vmatprep.subr.mxu0 %v85
    %172 = vmatpush1.msra.mxu0 %v84
    %173 = vmatprep.subr.mxu0 %v87
    %174 = vmatpush1.msra.mxu0 %v86
    %175 = vmatprep.subr.mxu0 %v89
    %176 = vmatpush1.msra.mxu0 %v88
    %177 = vmatprep.subr.mxu0 %v91
    %178 = vmatpush1.msra.mxu0 %v90
    %179 = vmatprep.subr.mxu0 %v93
    %180 = vmatpush1.msra.mxu0 %v92
    %181 = vmatprep.subr.mxu0 %v95
    %182 = vmatpush1.msra.mxu0 %v94
    %183 = vmatprep.subr.mxu0 %v97
    %184 = vmatpush1.msra.mxu0 %v96
    %185 = vmatprep.subr.mxu0 %v99
    %186 = vmatpush1.msra.mxu0 %v98
    %187 = vmatprep.subr.mxu0 %v101
    %188 = vmatpush1.msra.mxu0 %v100
    %189 = vmatprep.subr.mxu0 %v103
    %190 = vmatpush1.msra.mxu0 %v102
    %191 = vmatprep.subr.mxu0 %v105
    %192 = vmatpush1.msra.mxu0 %v104
    %193 = vmatprep.mubr.f32.mxu0 %v115
    %194 = vmatmul.mubr.f32.gmra.mrb[0].mxu0 %v111
    %v195 = vpop.f32.mrb[0].mxu0
    %v196 = vadd.f32 %v122, %v195
    %v197 = vpop.f32.mrb[0].mxu0
    %v198 = vadd.f32 %v126, %v197
    %199 = vdwg.mxu0
    %v202 = vcombine.low %v196, %v198
    %v204 = vunpack.c.l.s4 1966171168
    %v205 = vunpack.c.0.s8 %v204
    %v206 = vlaneseq
    %v207 = vshrl.u32 %v206, 7
    %v208 = vsub.s32 %v205, %v207
    %v209 = vrot.slane %v202, %v208
    %v211 = vunpack.c.l.s4 1966171168
    %v212 = vunpack.c.0.s8 %v211
    %v213 = vlaneseq
    %v214 = vshrl.u32 %v213, 7
    %v215 = vsub.s32 %v212, %v214
    %v216 = vrot.slane %v209, %v215
    %v218 = vlaneseq
    %vm219 = vcmp.ge.s32.totalorder %v218, 0
    %vm220 = vcmp.lt.s32.totalorder %v218, 256
    %vm221 = vmand %vm219, %vm220
    %222 = vst.msk [vmem:[#allocation7] sm:$0x3] %vm221, %v216
    // Predicated region
    $region22: #{tpu_custom_call.1} parent=1 // pred_check
      _
    $region23: #{tpu_custom_call.1} parent=1 // pred_check_branch
      %224 = sbr.rel (0) target = $region25
    $region24: #{tpu_custom_call.1} parent=1 // pred_region
      %s226 = ssub.s32 32, 32
      %227 = vsyncadd [#allocation4], %s226
      %s229 = sshll.u32 [#allocation7], 4
      %s230 = int_to_ptr.vmem [resolvable:$true] %s229
      %232 = dma.vmem_to_hbm [thread:$0]  %s230, 32, %s3, [#allocation4]
    $region25: #{tpu_custom_call.1} parent=1 // pred_fallthru
      _
    // Predicated region
    $region26: #{tpu_custom_call.1} parent=1 // pred_check
      _
    $region27: #{tpu_custom_call.1} parent=1 // pred_check_branch
      %234 = sbr.rel (0) target = $region29
    $region28: #{tpu_custom_call.1} parent=1 // pred_region
      %235 = dma.done [#allocation4], 32
    $region29: #{tpu_custom_call.1} parent=1 // pred_fallthru
      _
    %236 = vsyncpa [#allocation3], 1
    %237 = vsyncpa [#allocation6], 1
    %238 = vsyncpa [#allocation4], 1

</llo_original>
